<compile_context>
chip_gen: v5e
topology: v5e:2x2
jax: 0.10.0
libtpu: 0.0.40
codegen_flags: <defaults>
</compile_context>

<pallas_src>
import jax
import jax.numpy as jnp
from jax import lax
from jax.experimental import pallas as pl
from jax.experimental.pallas import tpu as pltpu


def _round_up(x, m):
    return ((x + m - 1) // m) * m


def _tpu_generation():
    """Best-effort TPU generation detection (falls back to 6)."""
    try:
        kind = jax.devices()[0].device_kind.lower()
    except Exception:
        return 6
    for tok, gen in (("v7", 7), ("v6", 6), ("v5", 5), ("v4", 4)):
        if tok in kind:
            return gen
    return 6


def _pick_tile(dim, prefs, align):
    """Pick the largest preferred tile whose padding waste stays bounded.

    Prefers big (256/512-aligned) tiles even at the cost of a few extra zero
    rows/cols; falls back to a single full-extent tile for tiny dims.
    """
    base = _round_up(max(dim, 1), align)
    limit = (base * 4) // 3          # allow up to ~33% padding for a bigger tile
    for cand in prefs:               # descending preference
        if _round_up(dim, cand) <= limit:
            return cand
    return base                      # tiny dim: single tile covering it


def _select_tiles(M, N, K, in_dtype, out_dtype, gen):
    in_bytes = jnp.dtype(in_dtype).itemsize
    out_bytes = jnp.dtype(out_dtype).itemsize
    # Packed dtypes tile sublanes in pairs/quads.
    sub = {4: 8, 2: 16, 1: 32}.get(in_bytes, 8)

    m_prefs = (512, 256, 128)                    # 256-aligned for v6e/v7x MXU
    n_prefs = (512, 256, 128)
    k_prefs = (1024, 512, 256, 128) if in_bytes < 4 else (512, 256, 128)

    tm = _pick_tile(M, m_prefs, sub)
    tn = _pick_tile(N, n_prefs, 128)
    tk = _pick_tile(K, k_prefs, 128)

    # VMEM check: double-buffered x/w/out tiles + f32 accumulator scratch.
    def usage(tm_, tn_, tk_):
        return (2 * tm_ * tk_ * in_bytes        # x (double-buffered)
                + 2 * tk_ * tn_ * in_bytes      # w (double-buffered)
                + 2 * tm_ * tn_ * out_bytes     # out (double-buffered)
                + tm_ * tn_ * 4)                # f32 accumulator

    budget = (40 << 20) if gen >= 7 else (96 << 20)   # v7x has 64 MiB physical
    while usage(tm, tn, tk) > budget and tk > 128:
        tk //= 2
    while usage(tm, tn, tk) > budget and tn > 128:
        tn //= 2
    while usage(tm, tn, tk) > budget and tm > sub:
        tm = max(_round_up(tm // 2, sub), sub)

    Mp = _round_up(M, tm)
    Np = _round_up(N, tn)
    Kp = _round_up(K, tk)

    # v7x: 2 TensorCores share the "parallel" grid axes; make sure tiny
    # problems expose >= 2 blocks so both cores get work.
    if gen >= 7 and (Mp // tm) * (Np // tn) == 1:
        if M >= 2 * sub:
            tm = _round_up(max(tm // 2, sub), sub)
            Mp = _round_up(M, tm)
        elif N >= 256:
            tn = max(tn // 2, 128)
            Np = _round_up(N, tn)

    need = usage(tm, tn, tk)
    ceiling = (56 << 20) if gen >= 7 else (100 << 20)
    vmem_limit = int(min(ceiling, max(need + (8 << 20), 32 << 20)))

    return tm, tn, tk, Mp, Np, Kp, vmem_limit


def _matmul_kernel(x_ref, w_ref, o_ref, acc_ref):
    # x_ref: (tm, tk); w_ref: (tn, tk) in native PyTorch (N, K) layout;
    # o_ref: (tm, tn); acc_ref: (tm, tn) f32.
    @pl.when(pl.program_id(2) == 0)
    def _():
        acc_ref[...] = jnp.zeros_like(acc_ref)

    # Contract K (axis 1 of both operands) == x @ w.T, MXU consumes the
    # transposed RHS directly (no per-call weight transpose in HBM).
    acc_ref[...] += lax.dot_general(
        x_ref[...], w_ref[...],
        dimension_numbers=(((1,), (1,)), ((), ())),
        preferred_element_type=jnp.float32,
    )

    @pl.when(pl.program_id(2) == pl.num_programs(2) - 1)
    def _():
        o_ref[...] = acc_ref[...].astype(o_ref.dtype)


def _matmul_bias_kernel(x_ref, w_ref, b_ref, o_ref, acc_ref):
    # Same as above, plus a (1, tn) f32 bias row added once at finalize (f32
    # epilogue even for sub-32-bit compute dtypes, v5e has no bf16 VPU).
    @pl.when(pl.program_id(2) == 0)
    def _():
        acc_ref[...] = jnp.zeros_like(acc_ref)

    acc_ref[...] += lax.dot_general(
        x_ref[...], w_ref[...],
        dimension_numbers=(((1,), (1,)), ((), ())),
        preferred_element_type=jnp.float32,
    )

    @pl.when(pl.program_id(2) == pl.num_programs(2) - 1)
    def _():
        o_ref[...] = (acc_ref[...] + b_ref[...].astype(jnp.float32)).astype(
            o_ref.dtype
        )


def mlg_linear(x, weight, bias=None, *, compute_dtype=None):
    """out = x @ weight.T + bias, matching F.linear(x, weight, bias).

    x:      (..., in_features)
    weight: (out_features, in_features)   [PyTorch nn.Linear convention]
    bias:   (out_features,) or None
    compute_dtype: optionally cast x/weight at the kernel boundary (bfloat16 is
        recommended on v6e/v7x: ~2-3x MXU throughput and half the HBM/VMEM
        traffic).  Accumulation and the bias epilogue stay f32; the output
        keeps x's original dtype.  Default: keep x's dtype (module semantics).
    """
    orig_shape = x.shape
    in_features = orig_shape[-1]
    out_features = weight.shape[0]
    assert weight.shape == (out_features, in_features)

    out_dtype = x.dtype

    x2 = x.reshape(-1, in_features)
    if compute_dtype is not None:
        x2 = x2.astype(compute_dtype)
        weight = weight.astype(compute_dtype)
    in_dtype = x2.dtype

    M, K = x2.shape
    N = out_features

    gen = _tpu_generation()
    tm, tn, tk, Mp, Np, Kp, vmem_limit = _select_tiles(
        M, N, K, in_dtype, out_dtype, gen
    )

    # Zero-pad to tile-aligned sizes (zeros are contraction-neutral; padded
    # output rows/cols are sliced off below).  The weight pad only costs an
    # HBM pass when N/K aren't already tile-aligned; for static deployment
    # shapes, pre-pad the weight once at load time and pass it in directly.
    if (Mp, Kp) != (M, K):
        x2 = jnp.pad(x2, ((0, Mp - M), (0, Kp - K)))
    w = weight
    if (Np, Kp) != (N, K):
        w = jnp.pad(w, ((0, Np - N), (0, Kp - K)))

    grid = (Mp // tm, Np // tn, Kp // tk)

    x_spec = pl.BlockSpec((tm, tk), lambda i, j, k: (i, k))
    w_spec = pl.BlockSpec((tn, tk), lambda i, j, k: (j, k))   # (N, K) layout
    o_spec = pl.BlockSpec((tm, tn), lambda i, j, k: (i, j))
    scratch = [pltpu.VMEM((tm, tn), jnp.float32)]

    cparams = pltpu.CompilerParams(
        dimension_semantics=("parallel", "parallel", "arbitrary"),
        vmem_limit_bytes=vmem_limit,
    )
    cost = pl.CostEstimate(
        flops=2 * Mp * Np * Kp,
        transcendentals=0,
        bytes_accessed=(
            Mp * Kp * jnp.dtype(in_dtype).itemsize
            + Np * Kp * jnp.dtype(in_dtype).itemsize
            + Mp * Np * jnp.dtype(out_dtype).itemsize
        ),
    )

    if bias is None:
        out = pl.pallas_call(
            _matmul_kernel,
            out_shape=jax.ShapeDtypeStruct((Mp, Np), out_dtype),
            grid_spec=pltpu.PrefetchScalarGridSpec(
                num_scalar_prefetch=0,
                grid=grid,
                in_specs=[x_spec, w_spec],
                out_specs=o_spec,
                scratch_shapes=scratch,
            ),
            compiler_params=cparams,
            cost_estimate=cost,
        )(x2, w)
    else:
        # Keep bias in f32 until the final cast.
        b = bias.astype(jnp.float32).reshape(1, N)
        if Np != N:
            b = jnp.pad(b, ((0, 0), (0, Np - N)))
        b_spec = pl.BlockSpec((1, tn), lambda i, j, k: (0, j))
        out = pl.pallas_call(
            _matmul_bias_kernel,
            out_shape=jax.ShapeDtypeStruct((Mp, Np), out_dtype),
            grid_spec=pltpu.PrefetchScalarGridSpec(
                num_scalar_prefetch=0,
                grid=grid,
                in_specs=[x_spec, w_spec, b_spec],
                out_specs=o_spec,
                scratch_shapes=scratch,
            ),
            compiler_params=cparams,
            cost_estimate=cost,
        )(x2, w, b)

    out = out[:M, :N]
    return out.reshape(*orig_shape[:-1], N)


if __name__ == "__main__":
    key = jax.random.PRNGKey(0)
    k_x, k_w, k_b = jax.random.split(key, 3)

    batch = 8
    in_features = 32
    out_features = 64

    # Deterministic parameter init (kaiming_normal_-style: std = sqrt(2/fan_in)).
    weight = jax.random.normal(k_w, (out_features, in_features), jnp.float32)
    weight = weight * jnp.sqrt(2.0 / in_features)

    x = jax.random.normal(k_x, (batch, in_features), jnp.float32)
    ref = x @ weight.T

    # Module default: bias=False, full precision.
    out = mlg_linear(x, weight, bias=None)
    out = jax.block_until_ready(out)
    assert out.shape == (batch, out_features)
    assert jnp.allclose(out, ref, atol=1e-4, rtol=1e-4), "mismatch (no bias)"

    # bias=True specialization.
    bound = 1.0 / jnp.sqrt(in_features)
    bias = jax.random.uniform(
        k_b, (out_features,), jnp.float32, minval=-bound, maxval=bound
    )
    out_b = mlg_linear(x, weight, bias=bias)
    out_b = jax.block_until_ready(out_b)
    ref_b = ref + bias[None, :]
    assert jnp.allclose(out_b, ref_b, atol=1e-4, rtol=1e-4), "mismatch (bias)"

    # bf16 compute path (recommended on v6e/v7x); accumulation stays f32.
    out_bf = mlg_linear(x, weight, bias=None, compute_dtype=jnp.bfloat16)
    out_bf = jax.block_until_ready(out_bf)
    assert out_bf.dtype == x.dtype
    assert jnp.allclose(out_bf, ref, atol=5e-2, rtol=5e-2), "mismatch (bf16)"

    print("KERNEL_OK")
</pallas_src>

<mosaic_0001>
module attributes {stable_mosaic.version = 11 : i64} {
  func.func @_matmul_kernel(%arg0: i32, %arg1: i32, %arg2: i32, %arg3: memref<8x128xf32, #tpu.memory_space<vmem>>, %arg4: memref<128x128xf32, #tpu.memory_space<vmem>>, %arg5: memref<8x128xf32, #tpu.memory_space<vmem>>, %arg6: memref<8x128xf32, #tpu.memory_space<vmem>>) attributes {dimension_semantics = [#tpu.dimension_semantics<parallel>, #tpu.dimension_semantics<parallel>, #tpu.dimension_semantics<arbitrary>], iteration_bounds = array<i64: 1, 1, 1>, scalar_prefetch = 0 : i64, scratch_operands = 1 : i64, tpu.core_type = #tpu.core_type<tc>, window_params = [{transform_indices = @transform_0, window_bounds = array<i64: 8, 128>}, {transform_indices = @transform_1, window_bounds = array<i64: 128, 128>}, {transform_indices = @transform_2, window_bounds = array<i64: 8, 128>}]} {
    %c0_i32 = arith.constant 0 : i32
    %0 = arith.cmpi eq, %arg2, %c0_i32 : i32
    %1 = arith.extui %0 : i1 to i32
    %c0_i32_0 = arith.constant 0 : i32
    %2 = arith.cmpi ne, %1, %c0_i32_0 : i32
    scf.if %2 {
      %cst_10 = arith.constant 0.000000e+00 : f32
      %12 = vector.broadcast %cst_10 : f32 to vector<8x128xf32>
      %c0_11 = arith.constant 0 : index
      %c0_12 = arith.constant 0 : index
      %13 = vector.load %arg6[%c0_11, %c0_12] : memref<8x128xf32, #tpu.memory_space<vmem>>, vector<8x128xf32>
      tpu.vector_store %arg6[%c0_11, %c0_12], %12 {strides = array<i32>} : memref<8x128xf32, #tpu.memory_space<vmem>>, vector<8x128xf32>,
    } else {
    }
    %c0 = arith.constant 0 : index
    %c0_1 = arith.constant 0 : index
    %3 = vector.load %arg6[%c0, %c0_1] : memref<8x128xf32, #tpu.memory_space<vmem>>, vector<8x128xf32>
    %c0_2 = arith.constant 0 : index
    %c0_3 = arith.constant 0 : index
    %4 = vector.load %arg3[%c0_2, %c0_3] : memref<8x128xf32, #tpu.memory_space<vmem>>, vector<8x128xf32>
    %c0_4 = arith.constant 0 : index
    %c0_5 = arith.constant 0 : index
    %5 = vector.load %arg4[%c0_4, %c0_5] : memref<128x128xf32, #tpu.memory_space<vmem>>, vector<128x128xf32>
    %cst = arith.constant dense<0.000000e+00> : vector<8x128xf32>
    %6 = tpu.matmul %4, %5, %cst {dimension_numbers = #tpu.dot_dimension_numbers<[1], [1], [0], [0], [0, 0, 1, 0], [], []>} : vector<8x128xf32>, vector<128x128xf32>, vector<8x128xf32> -> vector<8x128xf32>
    %7 = arith.addf %3, %6 : vector<8x128xf32>
    %c0_6 = arith.constant 0 : index
    %c0_7 = arith.constant 0 : index
    %8 = vector.load %arg6[%c0_6, %c0_7] : memref<8x128xf32, #tpu.memory_space<vmem>>, vector<8x128xf32>
    tpu.vector_store %arg6[%c0_6, %c0_7], %7 {strides = array<i32>} : memref<8x128xf32, #tpu.memory_space<vmem>>, vector<8x128xf32>,
    %c0_i32_8 = arith.constant 0 : i32
    %9 = arith.cmpi eq, %arg2, %c0_i32_8 : i32
    %10 = arith.extui %9 : i1 to i32
    %c0_i32_9 = arith.constant 0 : i32
    %11 = arith.cmpi ne, %10, %c0_i32_9 : i32
    scf.if %11 {
      %c0_10 = arith.constant 0 : index
      %c0_11 = arith.constant 0 : index
      %12 = vector.load %arg6[%c0_10, %c0_11] : memref<8x128xf32, #tpu.memory_space<vmem>>, vector<8x128xf32>
      %c0_12 = arith.constant 0 : index
      %c0_13 = arith.constant 0 : index
      %13 = vector.load %arg5[%c0_12, %c0_13] : memref<8x128xf32, #tpu.memory_space<vmem>>, vector<8x128xf32>
      tpu.vector_store %arg5[%c0_12, %c0_13], %12 {strides = array<i32>} : memref<8x128xf32, #tpu.memory_space<vmem>>, vector<8x128xf32>,
    } else {
    }
    return
  }
  func.func @transform_0(%arg0: i32, %arg1: i32, %arg2: i32) -> (i32, i32) {
    %c0_i32 = arith.constant 0 : i32
    return %arg0, %arg2 : i32, i32
  }
  func.func @transform_1(%arg0: i32, %arg1: i32, %arg2: i32) -> (i32, i32) {
    %c0_i32 = arith.constant 0 : i32
    return %arg1, %arg2 : i32, i32
  }
  func.func @transform_2(%arg0: i32, %arg1: i32, %arg2: i32) -> (i32, i32) {
    %c0_i32 = arith.constant 0 : i32
    return %arg0, %arg1 : i32, i32
  }
}

</mosaic_0001>

<llo_original>
// kernel: tpu_custom_call.1
$region0: #{tpu_custom_call.1}
  #allocation0 [shape = 'u32[]', space=smem, size = 0x4, offset = 0x4, fixed_abs, tag = 'smem constant byte address 0x4 - core index']
  #allocation1 [shape = 'u32[72,128]{1,0:T(1,128)}', space=vmem, size = 0x9000, scoped, tag = 'internal scratch']
  #allocation2 [shape = 'f32[8,128]{1,0:T(8,128)}', space=vmem, size = 0x1000, scoped, tag = 'scratch operand']
  %s0 = inlined_call_operand.hbm [shape: f32[8,128], index: 0, kind: input, shape index: {}]
  %s1 = inlined_call_operand.hbm [shape: f32[128,128], index: 1, kind: input, shape index: {}]
  %s2 = inlined_call_operand.hbm [shape: f32[8,128], index: 2, kind: output, shape index: {}]
  %s3 = sld [smem:[#allocation0]]
  $region34: #{tpu_custom_call.1} parent=0
    _
  %s5 = ssub.s32 1, %s3
  %s6 = scalar_select 0, %s5, %s3
  $region1: #{tpu_custom_call.1} parent=0
    #allocation3 [shape = 'u8[4096]{0}', space=vmem, size = 0x1000, scoped, tag = 'input window, operand 0, single buffered']
    #allocation4 [shape = 's32[1]{0}', space=sflag, size = 0x4, scoped, tag = 'scoped memory for tpu_custom_call.1']
    #allocation5 [shape = 's32[1]{0}', space=sflag, size = 0x4, scoped, tag = 'scoped memory for tpu_custom_call.1']
    #allocation6 [shape = 'u8[65536]{0}', space=vmem, size = 0x10000, scoped, tag = 'input window, operand 1, single buffered']
    #allocation7 [shape = 's32[1]{0}', space=sflag, size = 0x4, scoped, tag = 'scoped memory for tpu_custom_call.1']
    #allocation8 [shape = 'u8[4096]{0}', space=vmem, size = 0x1000, scoped, tag = 'output window, operand 0, single buffered']
    %7 = vsyncpa [#allocation4], 0
    %8 = vsyncpa [#allocation7], 0
    %9 = vsyncpa [#allocation5], 0
    // Predicated region
    $region2: #{tpu_custom_call.1} parent=1 // pred_check
      _
    $region3: #{tpu_custom_call.1} parent=1 // pred_check_branch
      %11 = sbr.rel (0) target = $region5
    $region4: #{tpu_custom_call.1} parent=1 // pred_region
      %13 = vsyncadd [#allocation4], 0
      %s15 = sshll.u32 %s0, 4
      %s16 = int_to_ptr.hbm [resolvable:$true] %s15
      %s17 = sshll.u32 [#allocation3], 4
      %s18 = int_to_ptr.vmem [resolvable:$true] %s17
      %20 = dma.hbm_to_vmem [thread:$0]  %s16, 128, %s18, [#allocation4]
    $region5: #{tpu_custom_call.1} parent=1 // pred_fallthru
      _
    // Predicated region
    $region6: #{tpu_custom_call.1} parent=1 // pred_check
      _
    $region7: #{tpu_custom_call.1} parent=1 // pred_check_branch
      %22 = sbr.rel (0) target = $region9
    $region8: #{tpu_custom_call.1} parent=1 // pred_region
      %24 = vsyncadd [#allocation7], 0
      %s25 = sshll.u32 %s1, 4
      %s26 = int_to_ptr.hbm [resolvable:$true] %s25
      %s27 = sshll.u32 [#allocation6], 4
      %s28 = int_to_ptr.vmem [resolvable:$true] %s27
      %33 = dma.hbm_to_vmem [thread:$0]  %s26, 2048, %s28, [#allocation7], 128, 128, 8
    $region9: #{tpu_custom_call.1} parent=1 // pred_fallthru
      _
    // Predicated region
    $region10: #{tpu_custom_call.1} parent=1 // pred_check
      _
    $region11: #{tpu_custom_call.1} parent=1 // pred_check_branch
      %35 = sbr.rel (0) target = $region13
    $region12: #{tpu_custom_call.1} parent=1 // pred_region
      %37 = dma.done [#allocation4], 128
    $region13: #{tpu_custom_call.1} parent=1 // pred_fallthru
      _
    // Predicated region
    $region14: #{tpu_custom_call.1} parent=1 // pred_check
      _
    $region15: #{tpu_custom_call.1} parent=1 // pred_check_branch
      %39 = sbr.rel (0) target = $region17
    $region16: #{tpu_custom_call.1} parent=1 // pred_region
      %41 = dma.done [#allocation7], 2048
    $region17: #{tpu_custom_call.1} parent=1 // pred_fallthru
      _
    %p42 = scmp.eq.s32.totalorder 0, 0
    // Predicated region
    $region18: #{tpu_custom_call.1} parent=1 // pred_check
      %p43 = pneg %p42
    $region19: #{tpu_custom_call.1} parent=1 // pred_check_branch
      %45 = sbr.rel (%p43) target = $region21
    $region20: #{tpu_custom_call.1} parent=1 // pred_region
      %46 = vst [vmem:[#allocation2] sm:$0xff] 0.0
    $region21: #{tpu_custom_call.1} parent=1 // pred_fallthru
      _
    %v47 = vld [vmem:[#allocation2] sm:$0xff]
    %v48 = vld [vmem:[#allocation3] sm:$0xff]
    %v49 = vld [vmem:[#allocation6] sm:$0xff]
    %v50 = vld [vmem:[#allocation6 + $0x8] sm:$0xff]
    %v51 = vld [vmem:[#allocation6 + $0x10] sm:$0xff]
    %v52 = vld [vmem:[#allocation6 + $0x18] sm:$0xff]
    %v53 = vld [vmem:[#allocation6 + $0x20] sm:$0xff]
    %v54 = vld [vmem:[#allocation6 + $0x28] sm:$0xff]
    %v55 = vld [vmem:[#allocation6 + $0x30] sm:$0xff]
    %v56 = vld [vmem:[#allocation6 + $0x38] sm:$0xff]
    %v57 = vld [vmem:[#allocation6 + $0x40] sm:$0xff]
    %v58 = vld [vmem:[#allocation6 + $0x48] sm:$0xff]
    %v59 = vld [vmem:[#allocation6 + $0x50] sm:$0xff]
    %v60 = vld [vmem:[#allocation6 + $0x58] sm:$0xff]
    %v61 = vld [vmem:[#allocation6 + $0x60] sm:$0xff]
    %v62 = vld [vmem:[#allocation6 + $0x68] sm:$0xff]
    %v63 = vld [vmem:[#allocation6 + $0x70] sm:$0xff]
    %v64 = vld [vmem:[#allocation6 + $0x78] sm:$0xff]
    %65 = vmatpush.xpose.msra.mxu0 %v64
    %66 = vmatpush.xpose.msra.mxu0 %v63
    %67 = vmatpush.xpose.msra.mxu0 %v62
    %68 = vmatpush.xpose.msra.mxu0 %v61
    %69 = vmatpush.xpose.msra.mxu0 %v60
    %70 = vmatpush.xpose.msra.mxu0 %v59
    %71 = vmatpush.xpose.msra.mxu0 %v58
    %72 = vmatpush.xpose.msra.mxu0 %v57
    %73 = vmatpush.xpose.msra.mxu0 %v56
    %74 = vmatpush.xpose.msra.mxu0 %v55
    %75 = vmatpush.xpose.msra.mxu0 %v54
    %76 = vmatpush.xpose.msra.mxu0 %v53
    %77 = vmatpush.xpose.msra.mxu0 %v52
    %78 = vmatpush.xpose.msra.mxu0 %v51
    %79 = vmatpush.xpose.msra.mxu0 %v50
    %80 = vmatpush.xpose.msra.mxu0 %v49
    %81 = vmatmul.f32.gmra.mxu0 %v48
    %v82 = vpop.f32.mrf.mxu0
    %v83 = vadd.f32 0.0, %v82
    %84 = vdwg.mxu0
    %v85 = vadd.f32 %v47, %v83
    %86 = vst [vmem:[#allocation2] sm:$0xff] %v85
    // Predicated region
    $region22: #{tpu_custom_call.1} parent=1 // pred_check
      %p87 = pneg %p42
    $region23: #{tpu_custom_call.1} parent=1 // pred_check_branch
      %89 = sbr.rel (%p87) target = $region25
    $region24: #{tpu_custom_call.1} parent=1 // pred_region
      %v90 = vld [vmem:[#allocation2] sm:$0xff]
      %91 = vst [vmem:[#allocation8] sm:$0xff] %v90
    $region25: #{tpu_custom_call.1} parent=1 // pred_fallthru
      _
    // Predicated region
    $region26: #{tpu_custom_call.1} parent=1 // pred_check
      _
    $region27: #{tpu_custom_call.1} parent=1 // pred_check_branch
      %93 = sbr.rel (0) target = $region29
    $region28: #{tpu_custom_call.1} parent=1 // pred_region
      %95 = vsyncadd [#allocation5], 0
      %s97 = sshll.u32 [#allocation8], 4
      %s98 = int_to_ptr.vmem [resolvable:$true] %s97
      %s99 = sshll.u32 %s2, 4
      %s100 = int_to_ptr.hbm [resolvable:$true] %s99
      %102 = dma.vmem_to_hbm [thread:$0]  %s98, 128, %s100, [#allocation5]
    $region29: #{tpu_custom_call.1} parent=1 // pred_fallthru
      _
    // Predicated region
    $region30: #{tpu_custom_call.1} parent=1 // pred_check
      _
    $region31: #{tpu_custom_call.1} parent=1 // pred_check_branch
      %104 = sbr.rel (0) target = $region33
    $region32: #{tpu_custom_call.1} parent=1 // pred_region
      %106 = dma.done [#allocation5], 128
    $region33: #{tpu_custom_call.1} parent=1 // pred_fallthru
      _
    %107 = vsyncpa [#allocation4], 1
    %108 = vsyncpa [#allocation7], 1
    %109 = vsyncpa [#allocation5], 1

</llo_original>
